<compile_context>
chip_gen: v6e
topology: v6e:2x2x1
jax: 0.10.0
libtpu: 0.0.40
codegen_flags: <defaults>
</compile_context>

<pallas_src>
import jax
import jax.numpy as jnp
from jax import lax
from jax.experimental import pallas as pl
from jax.experimental.pallas import tpu as pltpu

EPS = 1e-5  # PyTorch InstanceNorm2d default eps (affine=False, no running stats)


# ---------------------------------------------------------------------------
# Kernel
# ---------------------------------------------------------------------------
def _ffn_kernel(x_ref, w1_ref, b1_ref, w2_ref, b2_ref, o_ref):
    # x_ref/o_ref block: (R, HW) in the I/O dtype (R = nb*C rows = per-(sample,channel)
    # instances).  w1: (Hr, R) bf16 block-diagonal, b1: (Hr, 1) f32,
    # w2: (R, Hr) bf16 block-diagonal, b2: (R, 1) f32.   Hr = nb*Ch.
    hw = x_ref.shape[-1]
    inv_hw = 1.0 / hw  # static

    # fc1: 1x1 conv == (Hr, R) @ (R, HW) on the MXU; bf16 feed, f32 accumulation.
    x_bf = x_ref[...].astype(jnp.bfloat16)
    h = jnp.dot(w1_ref[...], x_bf, preferred_element_type=jnp.float32) + b1_ref[...]

    # InstanceNorm2d over spatial (lane) axis.  Two independent lane reductions
    # (sum, sum-of-squares) -> var = E[h^2] - mean^2 (f32, no serialized center chain).
    s1 = jnp.sum(h, axis=-1, keepdims=True)
    s2 = jnp.sum(h * h, axis=-1, keepdims=True)
    m1 = s1 * inv_hw
    v1 = s2 * inv_hw - m1 * m1
    h = (h - m1) * lax.rsqrt(v1 + EPS)

    # ReLU
    h = jnp.maximum(h, 0.0)

    # fc2: (R, Hr) @ (Hr, HW)
    y = jnp.dot(w2_ref[...], h.astype(jnp.bfloat16),
                preferred_element_type=jnp.float32) + b2_ref[...]

    # InstanceNorm2d (same independent-reduction form).
    t1 = jnp.sum(y, axis=-1, keepdims=True)
    t2 = jnp.sum(y * y, axis=-1, keepdims=True)
    m2 = t1 * inv_hw
    v2 = t2 * inv_hw - m2 * m2
    y = (y - m2) * lax.rsqrt(v2 + EPS)

    # drop_path(0.0) == identity, then residual.  x is re-read here (late) so its f32
    # copy is not live across the middle section.
    o_ref[...] = (y + x_ref[...].astype(jnp.float32)).astype(o_ref.dtype)


# ---------------------------------------------------------------------------
# Wrapper helpers
# ---------------------------------------------------------------------------
def _vmem_capacity_bytes():
    """Per-TensorCore VMEM of the actual chip; conservative fallback = v7x (64 MiB)."""
    try:
        info = pltpu.get_tpu_info()
        cap = getattr(info, "vmem_capacity_bytes", None)
        if cap:
            return int(cap)
    except Exception:
        pass
    return 64 * 1024 * 1024


def _block_vmem_estimate(rows, hid_rows, hw, io_itemsize):
    """Rough per-grid-step VMEM footprint (double-buffered I/O + f32/bf16 temporaries)."""
    r8 = lambda v: -(-v // 8) * 8
    r16 = lambda v: -(-v // 16) * 16
    r128 = lambda v: -(-v // 128) * 128
    hwp = r128(hw)
    # x + out blocks, double-buffered.
    bytes_io = 2 * (r8(rows) * hwp * io_itemsize) * 2
    # weights (bf16) + biases (f32), double-buffered (tiny).
    bytes_w = 2 * 2 * (r8(hid_rows) * r128(rows) + r8(rows) * r128(hid_rows)) \
              + 2 * 4 * (r8(hid_rows) + r8(rows)) * 128
    # f32 h / y intermediates + bf16 MXU feeds.
    bytes_tmp = (r8(hid_rows) + r8(rows)) * hwp * 4 + (r16(rows) + r16(hid_rows)) * hwp * 2
    return int((bytes_io + bytes_w + bytes_tmp) * 1.3)


def _pick_block_batch(n, c, ch, hw, io_itemsize, vmem_budget):
    """Pick samples-per-block nb (a divisor of n).

    Constraints / preferences:
      * nb*C is a multiple of 8 or equals the full row dim (keeps BlockSpecs
        (8,128)-legal and avoids in-kernel relayouts),
      * fits the VMEM budget,
      * keep >= 2 grid steps when N allows (both v7x TensorCores busy),
      * fill the f32 sublanes (nb*C >= 8) when C is tiny,
      * otherwise the smallest block (more parallel steps, less VMEM).
    """
    total_rows = n * c
    candidates = []
    for nb in range(1, n + 1):
        if n % nb:
            continue
        rows = nb * c
        if rows % 8 and rows != total_rows:
            continue
        candidates.append(nb)
    fitting = [nb for nb in candidates
               if _block_vmem_estimate(nb * c, nb * ch, hw, io_itemsize) <= vmem_budget]
    # TODO(synk): HW-tiled InstanceNorm stats path (two-pass sum/sumsq or Gram-matrix
    # trick) for single-sample blocks whose C*HW exceeds VMEM -- matters first on v7x.
    pool = fitting or candidates

    def score(nb):
        steps = n // nb
        return (steps >= 2 or n == 1,   # keep both v7x TensorCores busy when N allows
                nb * c >= 8,            # fill f32 sublanes when C is tiny
                -(nb * c))              # otherwise smallest block
    return max(pool, key=score)


# ---------------------------------------------------------------------------
# Public forward
# ---------------------------------------------------------------------------
def ffn_forward(x_nchw, graph, w1, b1, w2, b2):
    """x_nchw: (N, C, H, W). w1: (Ch, C, 1, 1), b1: (Ch,), w2: (C, Ch, 1, 1), b2: (C,).

    Returns (out_nchw, graph) with out dtype == x dtype (internal math in f32).
    """
    N, C, H, W = x_nchw.shape
    Ch = w1.shape[0]
    HW = H * W
    in_dtype = x_nchw.dtype
    io_itemsize = jnp.dtype(in_dtype).itemsize

    # NCHW -> (N*C, HW): pure (contiguous) reshape, no data movement in HBM.
    x2 = x_nchw.reshape(N * C, HW)

    vmem_cap = _vmem_capacity_bytes()
    nb = _pick_block_batch(N, C, Ch, HW, io_itemsize, int(vmem_cap * 0.75))
    R = nb * C          # rows per block
    Hr = nb * Ch        # hidden rows per block
    steps = N // nb

    # 1x1-conv weights as matmul operands (bf16 MXU feed).  When packing nb > 1
    # samples per block, replicate them block-diagonally so the conv stays a single
    # 2D matmul per block (only happens when C is tiny, so the replica is tiny too).
    w1_m = w1.reshape(Ch, C).astype(jnp.bfloat16)
    w2_m = w2.reshape(C, Ch).astype(jnp.bfloat16)
    if nb > 1:
        eye = jnp.eye(nb, dtype=jnp.bfloat16)
        w1_m = jnp.kron(eye, w1_m)                       # (Hr, R) block-diagonal
        w2_m = jnp.kron(eye, w2_m)                       # (R, Hr) block-diagonal
    b1_r = jnp.tile(b1.reshape(Ch, 1).astype(jnp.float32), (nb, 1))   # (Hr, 1)
    b2_r = jnp.tile(b2.reshape(C, 1).astype(jnp.float32), (nb, 1))    # (R, 1)

    # Chip-aware scoped-VMEM limit: always explicit, generous headroom over the
    # estimate, never above ~85% of physical VMEM (legal on v7x's 64 MiB/TC).
    est = _block_vmem_estimate(R, Hr, HW, io_itemsize)
    vmem_limit = int(min(max(est * 1.5, 20 * 1024 * 1024),
                         vmem_cap * 0.85,
                         96 * 1024 * 1024))

    out2 = pl.pallas_call(
        _ffn_kernel,
        out_shape=jax.ShapeDtypeStruct((N * C, HW), in_dtype),
        grid_spec=pltpu.PrefetchScalarGridSpec(
            num_scalar_prefetch=0,
            grid=(steps,),
            in_specs=[
                pl.BlockSpec((R, HW), lambda i: (i, 0)),   # x   (lane-dense, full sublanes)
                pl.BlockSpec((Hr, R), lambda i: (0, 0)),   # w1  (bf16, grid-invariant)
                pl.BlockSpec((Hr, 1), lambda i: (0, 0)),   # b1
                pl.BlockSpec((R, Hr), lambda i: (0, 0)),   # w2  (bf16, grid-invariant)
                pl.BlockSpec((R, 1), lambda i: (0, 0)),    # b2
            ],
            out_specs=pl.BlockSpec((R, HW), lambda i: (i, 0)),
        ),
        compiler_params=pltpu.CompilerParams(
            dimension_semantics=("parallel",),
            vmem_limit_bytes=vmem_limit,
        ),
    )(x2, w1_m, b1_r, w2_m, b2_r)

    # (N*C, HW) -> NCHW: pure reshape.
    return out2.reshape(N, C, H, W), graph


# ---------------------------------------------------------------------------
# Pure-JAX reference (mirrors the PyTorch forward)
# ---------------------------------------------------------------------------
def _ffn_reference(x_nchw, w1, b1, w2, b2, matmul_dtype=jnp.float32):
    """matmul_dtype=bf16 mirrors the kernel's MXU input precision; f32 is the faithful
    full-precision PyTorch semantics (centered-variance InstanceNorm)."""
    N, C, H, W = x_nchw.shape
    x = x_nchw.reshape(N, C, H * W).astype(jnp.float32)

    def inorm(v):  # v: (N, C, S)
        m = jnp.mean(v, axis=-1, keepdims=True)
        var = jnp.mean((v - m) ** 2, axis=-1, keepdims=True)
        return (v - m) * lax.rsqrt(var + EPS)

    def conv1x1(v, w, b):  # w: (Cout, Cin, 1, 1)
        y = jnp.einsum('oc,ncs->nos',
                       w[:, :, 0, 0].astype(matmul_dtype),
                       v.astype(matmul_dtype),
                       preferred_element_type=jnp.float32)
        return y + b[None, :, None]

    h = jnp.maximum(inorm(conv1x1(x, w1, b1)), 0.0)
    y = inorm(conv1x1(h, w2, b2))
    return (y + x).reshape(N, C, H, W)


# ---------------------------------------------------------------------------
# Self-test
# ---------------------------------------------------------------------------
if __name__ == "__main__":
    def run_case(key, N, C, H, W, hidden):
        k_x, k_g, k_w1, k_b1, k_w2, k_b2 = jax.random.split(key, 6)
        x = jax.random.normal(k_x, (N, C, H, W), dtype=jnp.float32)
        graph = jax.random.normal(k_g, (N, 8, 8), dtype=jnp.float32)  # passed through untouched
        w1 = 0.1 * jax.random.normal(k_w1, (hidden, C, 1, 1), dtype=jnp.float32)
        b1 = 0.1 * jax.random.normal(k_b1, (hidden,), dtype=jnp.float32)
        w2 = 0.1 * jax.random.normal(k_w2, (C, hidden, 1, 1), dtype=jnp.float32)
        b2 = 0.1 * jax.random.normal(k_b2, (C,), dtype=jnp.float32)

        out_x, out_graph = ffn_forward(x, graph, w1, b1, w2, b2)
        jax.block_until_ready(out_x)
        jax.block_until_ready(out_graph)

        ref_bf16 = _ffn_reference(x, w1, b1, w2, b2, matmul_dtype=jnp.bfloat16)
        ref_f32 = _ffn_reference(x, w1, b1, w2, b2, matmul_dtype=jnp.float32)

        assert out_x.shape == (N, C, H, W) and out_x.dtype == x.dtype
        # Tight check against the bf16-matmul mirror of the kernel math...
        assert jnp.allclose(out_x, ref_bf16, atol=5e-3, rtol=5e-3)
        # ...and a looser check against the full-f32 PyTorch-faithful reference.
        assert jnp.allclose(out_x, ref_f32, atol=5e-2, rtol=5e-2)
        assert jnp.array_equal(out_graph, graph)

        # bf16 I/O path (halves HBM traffic; internal accumulation/stats stay f32).
        out_bf, _ = ffn_forward(x.astype(jnp.bfloat16), graph, w1, b1, w2, b2)
        jax.block_until_ready(out_bf)
        assert out_bf.shape == (N, C, H, W) and out_bf.dtype == jnp.bfloat16
        assert jnp.allclose(out_bf.astype(jnp.float32), ref_f32, atol=1e-1, rtol=1e-1)

    key = jax.random.PRNGKey(0)
    k1, k2 = jax.random.split(key)
    # Case 1: N=2, C=4 -> one packed (8, 256) block (single grid step).
    run_case(k1, N=2, C=4, H=16, W=16, hidden=8)
    # Case 2: N=4, C=4 -> two packed (8, 256) blocks (multi-step grid, block-diag weights).
    run_case(k2, N=4, C=4, H=16, W=16, hidden=16)

    print("KERNEL_OK")
</pallas_src>

<mosaic_0001>
module attributes {stable_mosaic.version = 11 : i64} {
  func.func @_ffn_kernel(%arg0: i32, %arg1: memref<8x256xf32, #tpu.memory_space<vmem>>, %arg2: memref<16x8xbf16, #tpu.memory_space<vmem>>, %arg3: memref<16x1xf32, #tpu.memory_space<vmem>>, %arg4: memref<8x16xbf16, #tpu.memory_space<vmem>>, %arg5: memref<8x1xf32, #tpu.memory_space<vmem>>, %arg6: memref<8x256xf32, #tpu.memory_space<vmem>>) attributes {dimension_semantics = [#tpu.dimension_semantics<parallel>], iteration_bounds = array<i64: 1>, scalar_prefetch = 0 : i64, scratch_operands = 0 : i64, tpu.core_type = #tpu.core_type<tc>, window_params = [{transform_indices = @transform_0, window_bounds = array<i64: 8, 256>}, {pipeline_mode = #tpu.pipeline_mode<synchronous>, transform_indices = @transform_1, window_bounds = array<i64: 16, 8>}, {pipeline_mode = #tpu.pipeline_mode<synchronous>, transform_indices = @transform_2, window_bounds = array<i64: 16, 1>}, {pipeline_mode = #tpu.pipeline_mode<synchronous>, transform_indices = @transform_3, window_bounds = array<i64: 8, 16>}, {pipeline_mode = #tpu.pipeline_mode<synchronous>, transform_indices = @transform_4, window_bounds = array<i64: 8, 1>}, {transform_indices = @transform_5, window_bounds = array<i64: 8, 256>}]} {
    %c0 = arith.constant 0 : index
    %c0_0 = arith.constant 0 : index
    %0 = vector.load %arg1[%c0, %c0_0] : memref<8x256xf32, #tpu.memory_space<vmem>>, vector<8x256xf32>
    %1 = arith.truncf %0 : vector<8x256xf32> to vector<8x256xbf16>
    %c0_1 = arith.constant 0 : index
    %c0_2 = arith.constant 0 : index
    %2 = vector.load %arg2[%c0_1, %c0_2] : memref<16x8xbf16, #tpu.memory_space<vmem>>, vector<16x8xbf16>
    %cst = arith.constant dense<0.000000e+00> : vector<16x256xf32>
    %3 = tpu.matmul %2, %1, %cst {dimension_numbers = #tpu.dot_dimension_numbers<[1], [0], [0], [1], [0, 0, 1, 1], [], []>} : vector<16x8xbf16>, vector<8x256xbf16>, vector<16x256xf32> -> vector<16x256xf32>
    %c0_3 = arith.constant 0 : index
    %c0_4 = arith.constant 0 : index
    %4 = vector.load %arg3[%c0_3, %c0_4] : memref<16x1xf32, #tpu.memory_space<vmem>>, vector<16x1xf32>
    %5 = vector.broadcast %4 : vector<16x1xf32> to vector<16x256xf32>
    %6 = arith.addf %3, %5 : vector<16x256xf32>
    %cst_5 = arith.constant dense<0.000000e+00> : vector<16xf32>
    %7 = vector.multi_reduction <add>, %6, %cst_5 [1] : vector<16x256xf32> to vector<16xf32>
    %8 = vector.shape_cast %7 : vector<16xf32> to vector<16x1xf32>
    %9 = arith.mulf %6, %6 : vector<16x256xf32>
    %cst_6 = arith.constant dense<0.000000e+00> : vector<16xf32>
    %10 = vector.multi_reduction <add>, %9, %cst_6 [1] : vector<16x256xf32> to vector<16xf32>
    %11 = vector.shape_cast %10 : vector<16xf32> to vector<16x1xf32>
    %cst_7 = arith.constant 3.906250e-03 : f32
    %12 = vector.broadcast %cst_7 : f32 to vector<16x1xf32>
    %13 = arith.mulf %8, %12 : vector<16x1xf32>
    %cst_8 = arith.constant 3.906250e-03 : f32
    %14 = vector.broadcast %cst_8 : f32 to vector<16x1xf32>
    %15 = arith.mulf %11, %14 : vector<16x1xf32>
    %16 = arith.mulf %13, %13 : vector<16x1xf32>
    %17 = arith.subf %15, %16 : vector<16x1xf32>
    %18 = vector.broadcast %13 : vector<16x1xf32> to vector<16x256xf32>
    %19 = arith.subf %6, %18 : vector<16x256xf32>
    %cst_9 = arith.constant 9.99999974E-6 : f32
    %20 = vector.broadcast %cst_9 : f32 to vector<16x1xf32>
    %21 = arith.addf %17, %20 : vector<16x1xf32>
    %22 = math.rsqrt %21 : vector<16x1xf32>
    %23 = vector.broadcast %22 : vector<16x1xf32> to vector<16x256xf32>
    %24 = arith.mulf %19, %23 : vector<16x256xf32>
    %cst_10 = arith.constant 0.000000e+00 : f32
    %25 = vector.broadcast %cst_10 : f32 to vector<16x256xf32>
    %26 = arith.maximumf %24, %25 : vector<16x256xf32>
    %c0_11 = arith.constant 0 : index
    %c0_12 = arith.constant 0 : index
    %27 = vector.load %arg4[%c0_11, %c0_12] : memref<8x16xbf16, #tpu.memory_space<vmem>>, vector<8x16xbf16>
    %28 = arith.truncf %26 : vector<16x256xf32> to vector<16x256xbf16>
    %cst_13 = arith.constant dense<0.000000e+00> : vector<8x256xf32>
    %29 = tpu.matmul %27, %28, %cst_13 {dimension_numbers = #tpu.dot_dimension_numbers<[1], [0], [0], [1], [0, 0, 1, 1], [], []>} : vector<8x16xbf16>, vector<16x256xbf16>, vector<8x256xf32> -> vector<8x256xf32>
    %c0_14 = arith.constant 0 : index
    %c0_15 = arith.constant 0 : index
    %30 = vector.load %arg5[%c0_14, %c0_15] : memref<8x1xf32, #tpu.memory_space<vmem>>, vector<8x1xf32>
    %31 = vector.broadcast %30 : vector<8x1xf32> to vector<8x256xf32>
    %32 = arith.addf %29, %31 : vector<8x256xf32>
    %cst_16 = arith.constant dense<0.000000e+00> : vector<8xf32>
    %33 = vector.multi_reduction <add>, %32, %cst_16 [1] : vector<8x256xf32> to vector<8xf32>
    %34 = vector.shape_cast %33 : vector<8xf32> to vector<8x1xf32>
    %35 = arith.mulf %32, %32 : vector<8x256xf32>
    %cst_17 = arith.constant dense<0.000000e+00> : vector<8xf32>
    %36 = vector.multi_reduction <add>, %35, %cst_17 [1] : vector<8x256xf32> to vector<8xf32>
    %37 = vector.shape_cast %36 : vector<8xf32> to vector<8x1xf32>
    %cst_18 = arith.constant 3.906250e-03 : f32
    %38 = vector.broadcast %cst_18 : f32 to vector<8x1xf32>
    %39 = arith.mulf %34, %38 : vector<8x1xf32>
    %cst_19 = arith.constant 3.906250e-03 : f32
    %40 = vector.broadcast %cst_19 : f32 to vector<8x1xf32>
    %41 = arith.mulf %37, %40 : vector<8x1xf32>
    %42 = arith.mulf %39, %39 : vector<8x1xf32>
    %43 = arith.subf %41, %42 : vector<8x1xf32>
    %44 = vector.broadcast %39 : vector<8x1xf32> to vector<8x256xf32>
    %45 = arith.subf %32, %44 : vector<8x256xf32>
    %cst_20 = arith.constant 9.99999974E-6 : f32
    %46 = vector.broadcast %cst_20 : f32 to vector<8x1xf32>
    %47 = arith.addf %43, %46 : vector<8x1xf32>
    %48 = math.rsqrt %47 : vector<8x1xf32>
    %49 = vector.broadcast %48 : vector<8x1xf32> to vector<8x256xf32>
    %50 = arith.mulf %45, %49 : vector<8x256xf32>
    %c0_21 = arith.constant 0 : index
    %c0_22 = arith.constant 0 : index
    %51 = vector.load %arg1[%c0_21, %c0_22] : memref<8x256xf32, #tpu.memory_space<vmem>>, vector<8x256xf32>
    %52 = arith.addf %50, %51 : vector<8x256xf32>
    %c0_23 = arith.constant 0 : index
    %c0_24 = arith.constant 0 : index
    %53 = vector.load %arg6[%c0_23, %c0_24] : memref<8x256xf32, #tpu.memory_space<vmem>>, vector<8x256xf32>
    tpu.vector_store %arg6[%c0_23, %c0_24], %52 {strides = array<i32>} : memref<8x256xf32, #tpu.memory_space<vmem>>, vector<8x256xf32>,
    return
  }
  func.func @transform_0(%arg0: i32) -> (i32, i32) {
    %c0_i32 = arith.constant 0 : i32
    %c0_i32_0 = arith.constant 0 : i32
    return %arg0, %c0_i32 : i32, i32
  }
  func.func @transform_1(%arg0: i32) -> (i32, i32) {
    %c0_i32 = arith.constant 0 : i32
    %c0_i32_0 = arith.constant 0 : i32
    %c0_i32_1 = arith.constant 0 : i32
    return %c0_i32, %c0_i32_0 : i32, i32
  }
  func.func @transform_2(%arg0: i32) -> (i32, i32) {
    %c0_i32 = arith.constant 0 : i32
    %c0_i32_0 = arith.constant 0 : i32
    %c0_i32_1 = arith.constant 0 : i32
    return %c0_i32, %c0_i32_0 : i32, i32
  }
  func.func @transform_3(%arg0: i32) -> (i32, i32) {
    %c0_i32 = arith.constant 0 : i32
    %c0_i32_0 = arith.constant 0 : i32
    %c0_i32_1 = arith.constant 0 : i32
    return %c0_i32, %c0_i32_0 : i32, i32
  }
  func.func @transform_4(%arg0: i32) -> (i32, i32) {
    %c0_i32 = arith.constant 0 : i32
    %c0_i32_0 = arith.constant 0 : i32
    %c0_i32_1 = arith.constant 0 : i32
    return %c0_i32, %c0_i32_0 : i32, i32
  }
  func.func @transform_5(%arg0: i32) -> (i32, i32) {
    %c0_i32 = arith.constant 0 : i32
    %c0_i32_0 = arith.constant 0 : i32
    return %arg0, %c0_i32 : i32, i32
  }
}

</mosaic_0001>

<llo_original>
// kernel: tpu_custom_call.1
$region0: #{tpu_custom_call.1}
  #allocation0 [shape = 'u32[]', space=smem, size = 0x4, offset = 0x4, fixed_abs, tag = 'smem constant byte address 0x4 - core index']
  #allocation1 [shape = 'u32[144,128]{1,0:T(1,128)}', space=vmem, size = 0x12000, scoped, tag = 'internal scratch']
  %s0 = inlined_call_operand.vmem [shape: f32[8,256], index: 0, kind: input, shape index: {}]
  %s1 = inlined_call_operand.vmem [shape: bf16[16,8], index: 1, kind: input, shape index: {}]
  %s2 = inlined_call_operand.vmem [shape: f32[16,1], index: 2, kind: input, shape index: {}]
  %s3 = inlined_call_operand.vmem [shape: bf16[8,16], index: 3, kind: input, shape index: {}]
  %s4 = inlined_call_operand.vmem [shape: f32[8,1], index: 4, kind: input, shape index: {}]
  %s5 = inlined_call_operand.hbm [shape: f32[8,256], index: 5, kind: output, shape index: {}]
  %s6 = sld [smem:[#allocation0]]
  $region30: #{tpu_custom_call.1} parent=0
    _
  %s8 = ssub.s32 1, %s6
  %s9 = scalar_select 0, %s8, %s6
  $region1: #{tpu_custom_call.1} parent=0
    #allocation2 [shape = 'u8[8192]{0}', space=vmem, size = 0x2000, scoped, tag = 'output window, operand 0, single buffered']
    #allocation3 [shape = 's32[1]{0}', space=sflag, size = 0x4, scoped, tag = 'scoped memory for tpu_custom_call.1']
    %10 = vsyncpa [#allocation3], 0
    // Predicated region
    $region2: #{tpu_custom_call.1} parent=1 // pred_check
      _
    $region3: #{tpu_custom_call.1} parent=1 // pred_check_branch
      %12 = sbr.rel (0) target = $region5
    $region4: #{tpu_custom_call.1} parent=1 // pred_region
      _
    $region5: #{tpu_custom_call.1} parent=1 // pred_fallthru
      _
    // Predicated region
    $region6: #{tpu_custom_call.1} parent=1 // pred_check
      _
    $region7: #{tpu_custom_call.1} parent=1 // pred_check_branch
      %14 = sbr.rel (0) target = $region9
    $region8: #{tpu_custom_call.1} parent=1 // pred_region
      _
    $region9: #{tpu_custom_call.1} parent=1 // pred_fallthru
      _
    // Predicated region
    $region10: #{tpu_custom_call.1} parent=1 // pred_check
      _
    $region11: #{tpu_custom_call.1} parent=1 // pred_check_branch
      %16 = sbr.rel (0) target = $region13
    $region12: #{tpu_custom_call.1} parent=1 // pred_region
      _
    $region13: #{tpu_custom_call.1} parent=1 // pred_fallthru
      _
    // Predicated region
    $region14: #{tpu_custom_call.1} parent=1 // pred_check
      _
    $region15: #{tpu_custom_call.1} parent=1 // pred_check_branch
      %18 = sbr.rel (0) target = $region17
    $region16: #{tpu_custom_call.1} parent=1 // pred_region
      _
    $region17: #{tpu_custom_call.1} parent=1 // pred_fallthru
      _
    // Predicated region
    $region18: #{tpu_custom_call.1} parent=1 // pred_check
      _
    $region19: #{tpu_custom_call.1} parent=1 // pred_check_branch
      %20 = sbr.rel (0) target = $region21
    $region20: #{tpu_custom_call.1} parent=1 // pred_region
      _
    $region21: #{tpu_custom_call.1} parent=1 // pred_fallthru
      _
    %v22 = vld [vmem:[%s0] sm:$0xff]
    %v23 = vld [vmem:[%s0 + $0x8] sm:$0xff]
    %v24 = vpack.c.bf16 %v22, %v22
    %v25 = vpack.c.bf16 %v23, %v23
    %v26 = vld [vmem:[%s1] sm:$0xf]
    %v27 = vld [vmem:[%s1 + $0x4] sm:$0xf]
    %v28 = vld [vmem:[%s2] sm:$0xff]
    %v29 = vld [vmem:[%s2 + $0x8] sm:$0xff]
    %31 = vset.pattern.permute.xlu0 0
    %32 = vperm.xlu0 %31, %v28
    %v33 = vpop.permute.xlu0 %32
    %36 = vset.pattern.permute.xlu0 0
    %37 = vperm.xlu0 %36, %v29
    %v38 = vpop.permute.xlu0 %37
    %v42 = vunpack.c.l.b16 %v26
    %v43 = vunpack.c.l.b16 %v27
    %v44 = vpack.c.b16 %v43, %v42
    %vm45 = vcmask 64512
    %v47 = vsel %vm45, %v44, 0
    %vm49 = vcmask 1043456
    %v51 = vsel %vm49, %v24, 0
    %v54 = vsel %vm49, %v25, 0
    %56 = vmatprep.subr.bf16.mxu0 0
    %57 = vmatpush1.bf16.msra.mxu0 0
    %58 = vmatprep.subr.bf16.mxu0 0
    %59 = vmatpush1.bf16.msra.mxu0 0
    %60 = vmatprep.subr.bf16.mxu0 0
    %61 = vmatpush1.bf16.msra.mxu0 0
    %62 = vmatprep.subr.bf16.mxu0 0
    %63 = vmatpush1.bf16.msra.mxu0 0
    %64 = vmatprep.subr.bf16.mxu0 0
    %65 = vmatpush1.bf16.msra.mxu0 0
    %66 = vmatprep.subr.bf16.mxu0 0
    %67 = vmatpush1.bf16.msra.mxu0 0
    %68 = vmatprep.subr.bf16.mxu0 0
    %69 = vmatpush1.bf16.msra.mxu0 0
    %70 = vmatprep.subr.bf16.mxu0 %v54
    %71 = vmatpush1.bf16.msra.mxu0 %v51
    %72 = vmatprep.subr.bf16.mxu0 0
    %73 = vmatpush2.bf16.msra.mxu0 0
    %74 = vmatprep.subr.bf16.mxu0 0
    %75 = vmatpush2.bf16.msra.mxu0 0
    %76 = vmatprep.subr.bf16.mxu0 0
    %77 = vmatpush2.bf16.msra.mxu0 0
    %78 = vmatprep.subr.bf16.mxu0 0
    %79 = vmatpush2.bf16.msra.mxu0 0
    %80 = vmatprep.subr.bf16.mxu0 0
    %81 = vmatpush2.bf16.msra.mxu0 0
    %82 = vmatprep.subr.bf16.mxu0 0
    %83 = vmatpush2.bf16.msra.mxu0 0
    %84 = vmatprep.subr.bf16.mxu0 0
    %85 = vmatpush2.bf16.msra.mxu0 0
    %86 = vmatprep.subr.bf16.mxu0 0
    %87 = vmatpush2.bf16.msra.mxu0 0
    %88 = vmatprep.mubr.bf16.mxu0 0
    %89 = vmatmul.mubr.bf16.gmra.mxu0 %v47
    %v90 = vpop.f32.mrf.mxu0
    %v91 = vadd.f32 %v33, %v90
    %v92 = vpop.f32.mrf.mxu0
    %v93 = vadd.f32 %v33, %v92
    %v94 = vpop.f32.mrf.mxu0
    %v95 = vadd.f32 %v38, %v94
    %v96 = vpop.f32.mrf.mxu0
    %v97 = vadd.f32 %v38, %v96
    %98 = vdwg.mxu0
    %v99 = vadd.f32 %v91, %v93
    %100 = vadd.xlane.f32.xlu0 %v99
    %v101 = vpop.xlane.xlu0 %100
    %v102 = vadd.f32 %v95, %v97
    %103 = vadd.xlane.f32.xlu0 %v102
    %v104 = vpop.xlane.xlu0 %103
    %v105 = vmul.f32 %v91, %v91
    %v106 = vmul.f32 %v93, %v93
    %v107 = vmul.f32 %v95, %v95
    %v108 = vmul.f32 %v97, %v97
    %v109 = vadd.f32 %v105, %v106
    %110 = vadd.xlane.f32.xlu0 %v109
    %v111 = vpop.xlane.xlu0 %110
    %v112 = vadd.f32 %v107, %v108
    %113 = vadd.xlane.f32.xlu0 %v112
    %v114 = vpop.xlane.xlu0 %113
    %v115 = vmul.f32 %v101, 0.00390625
    %v116 = vmul.f32 %v104, 0.00390625
    %v117 = vmul.f32 %v111, 0.00390625
    %v118 = vmul.f32 %v114, 0.00390625
    %v119 = vmul.f32 %v115, %v115
    %v120 = vmul.f32 %v116, %v116
    %v121 = vsub.f32 %v117, %v119
    %v122 = vsub.f32 %v118, %v120
    %v123 = vsub.f32 %v91, %v115
    %v124 = vsub.f32 %v93, %v115
    %v125 = vsub.f32 %v95, %v116
    %v126 = vsub.f32 %v97, %v116
    %v127 = vadd.f32 %v121, 1e-05
    %v128 = vadd.f32 %v122, 1e-05
    %v129 = vrsqrt.pop %v127
    %v130 = vrsqrt.pop %v128
    %v131 = vmul.f32 %v123, %v129
    %v132 = vmul.f32 %v124, %v129
    %v133 = vmul.f32 %v125, %v130
    %v134 = vmul.f32 %v126, %v130
    %v135 = vmax.f32 %v131, 0.0
    %v136 = vmax.f32 %v132, 0.0
    %v137 = vmax.f32 %v133, 0.0
    %v138 = vmax.f32 %v134, 0.0
    %v139 = vld [vmem:[%s3] sm:$0xf]
    %v140 = vpack.c.bf16 %v137, %v135
    %v141 = vpack.c.bf16 %v138, %v136
    %v142 = vld [vmem:[%s4] sm:$0xff]
    %144 = vset.pattern.permute.xlu0 0
    %145 = vperm.xlu0 %144, %v142
    %v146 = vpop.permute.xlu0 %145
    %vm148 = vcmask 130048
    %v150 = vsel %vm148, %v139, 0
    %152 = vmatprep.subr.bf16.mxu0 0
    %153 = vmatpush1.bf16.msra.mxu0 0
    %154 = vmatprep.subr.bf16.mxu0 0
    %155 = vmatpush1.bf16.msra.mxu0 0
    %156 = vmatprep.subr.bf16.mxu0 0
    %157 = vmatpush1.bf16.msra.mxu0 0
    %158 = vmatprep.subr.bf16.mxu0 0
    %159 = vmatpush1.bf16.msra.mxu0 0
    %160 = vmatprep.subr.bf16.mxu0 0
    %161 = vmatpush1.bf16.msra.mxu0 0
    %162 = vmatprep.subr.bf16.mxu0 0
    %163 = vmatpush1.bf16.msra.mxu0 0
    %164 = vmatprep.subr.bf16.mxu0 0
    %165 = vmatpush1.bf16.msra.mxu0 0
    %166 = vmatprep.subr.bf16.mxu0 %v141
    %167 = vmatpush1.bf16.msra.mxu0 %v140
    %168 = vmatprep.subr.bf16.mxu0 0
    %169 = vmatpush2.bf16.msra.mxu0 0
    %170 = vmatprep.subr.bf16.mxu0 0
    %171 = vmatpush2.bf16.msra.mxu0 0
    %172 = vmatprep.subr.bf16.mxu0 0
    %173 = vmatpush2.bf16.msra.mxu0 0
    %174 = vmatprep.subr.bf16.mxu0 0
    %175 = vmatpush2.bf16.msra.mxu0 0
    %176 = vmatprep.subr.bf16.mxu0 0
    %177 = vmatpush2.bf16.msra.mxu0 0
    %178 = vmatprep.subr.bf16.mxu0 0
    %179 = vmatpush2.bf16.msra.mxu0 0
    %180 = vmatprep.subr.bf16.mxu0 0
    %181 = vmatpush2.bf16.msra.mxu0 0
    %182 = vmatprep.subr.bf16.mxu0 0
    %183 = vmatpush2.bf16.msra.mxu0 0
    %184 = vmatprep.mubr.bf16.mxu0 0
    %185 = vmatmul.mubr.bf16.gmra.mxu0 %v150
    %v186 = vpop.f32.mrf.mxu0
    %v187 = vadd.f32 %v146, %v186
    %v188 = vpop.f32.mrf.mxu0
    %v189 = vadd.f32 %v146, %v188
    %v190 = vpop.f32.mrf.mxu0
    %v191 = vpop.f32.mrf.mxu0
    %192 = vdwg.mxu0
    %v193 = vadd.f32 %v187, %v189
    %194 = vadd.xlane.f32.xlu0 %v193
    %v195 = vpop.xlane.xlu0 %194
    %v196 = vmul.f32 %v187, %v187
    %v197 = vmul.f32 %v189, %v189
    %v198 = vadd.f32 %v196, %v197
    %199 = vadd.xlane.f32.xlu0 %v198
    %v200 = vpop.xlane.xlu0 %199
    %v201 = vmul.f32 %v195, 0.00390625
    %v202 = vmul.f32 %v200, 0.00390625
    %v203 = vmul.f32 %v201, %v201
    %v204 = vsub.f32 %v202, %v203
    %v205 = vsub.f32 %v187, %v201
    %v206 = vsub.f32 %v189, %v201
    %v207 = vadd.f32 %v204, 1e-05
    %v208 = vrsqrt.pop %v207
    %v209 = vmul.f32 %v205, %v208
    %v210 = vmul.f32 %v206, %v208
    %v211 = vadd.f32 %v209, %v22
    %v212 = vadd.f32 %v210, %v23
    %213 = vst [vmem:[#allocation2] sm:$0xff] %v211
    %214 = vst [vmem:[#allocation2 + $0x8] sm:$0xff] %v212
    // Predicated region
    $region22: #{tpu_custom_call.1} parent=1 // pred_check
      _
    $region23: #{tpu_custom_call.1} parent=1 // pred_check_branch
      %216 = sbr.rel (0) target = $region25
    $region24: #{tpu_custom_call.1} parent=1 // pred_region
      %s218 = ssub.s32 256, 256
      %219 = vsyncadd [#allocation3], %s218
      %s221 = sshll.u32 [#allocation2], 4
      %s222 = int_to_ptr.vmem [resolvable:$true] %s221
      %224 = dma.vmem_to_hbm [thread:$0]  %s222, 256, %s5, [#allocation3]
    $region25: #{tpu_custom_call.1} parent=1 // pred_fallthru
      _
    // Predicated region
    $region26: #{tpu_custom_call.1} parent=1 // pred_check
      _
    $region27: #{tpu_custom_call.1} parent=1 // pred_check_branch
      %226 = sbr.rel (0) target = $region29
    $region28: #{tpu_custom_call.1} parent=1 // pred_region
      %227 = dma.done [#allocation3], 256
    $region29: #{tpu_custom_call.1} parent=1 // pred_fallthru
      _
    %228 = vsyncpa [#allocation3], 1

</llo_original>
